<compile_context>
chip_gen: v5e
topology: v5e:2x2
jax: 0.10.0
libtpu: 0.0.40
codegen_flags: <defaults>
</compile_context>

<pallas_src>
import functools

import jax
import jax.numpy as jnp
from jax.experimental import pallas as pl
from jax.experimental.pallas import tpu as pltpu


def _round_up(a, b):
    return -(-a // b) * b


def _cdiv(a, b):
    return -(-a // b)


# ---------------------------------------------------------------------------
# Kernels
# ---------------------------------------------------------------------------

def _matmul_kernel_inplace(x_ref, y_ref, o_ref):
    """K-reduction accumulating directly into the resident output tile.

    Valid when output dtype == accumulation dtype (f32 / int32): saves the
    tm*tn*4-byte scratch and the epilogue copy + extra store. grid=(i, j, k).
    """
    @pl.when(pl.program_id(2) == 0)
    def _():
        o_ref[...] = jnp.zeros_like(o_ref)

    o_ref[...] += jnp.dot(
        x_ref[...], y_ref[...], preferred_element_type=o_ref.dtype
    )


def _matmul_kernel_acc(x_ref, y_ref, o_ref, acc_ref):
    """K-reduction with a wide scratch accumulator (narrow output dtype)."""
    @pl.when(pl.program_id(2) == 0)
    def _():
        acc_ref[...] = jnp.zeros_like(acc_ref)

    acc_ref[...] += jnp.dot(
        x_ref[...], y_ref[...], preferred_element_type=acc_ref.dtype
    )

    @pl.when(pl.program_id(2) == pl.num_programs(2) - 1)
    def _():
        o_ref[...] = acc_ref[...].astype(o_ref.dtype)


def _matmul_kernel_direct(x_ref, y_ref, o_ref, *, acc_dtype):
    """Single K-step (or gridless) matmul: write the output directly."""
    o_ref[...] = jnp.dot(
        x_ref[...], y_ref[...], preferred_element_type=acc_dtype
    ).astype(o_ref.dtype)


# ---------------------------------------------------------------------------
# Tile / VMEM sizing
# ---------------------------------------------------------------------------

def _vmem_limits():
    """(vmem_limit_bytes for CompilerParams, tile-sizing budget)."""
    try:
        cap = int(pltpu.get_tpu_info().vmem_capacity_bytes)
    except Exception:
        cap = 64 * 1024 * 1024  # conservative: v7x per-TC VMEM
    vmem_limit = min(int(cap * 0.8), 100 * 1024 * 1024)
    tile_budget = int(vmem_limit * 0.85)  # headroom for compiler scratch
    return vmem_limit, tile_budget


def _num_tensorcores():
    try:
        return max(1, int(getattr(jax.devices()[0], "num_cores", 1)))
    except Exception:
        return 1


def _tile_configs(itemsize):
    """Preference-ordered (tm, tn, tk), dtype-aware.

    Narrow dtypes get larger tm/tn (HBM reuse ~ 2*tm*tn/((tm+tn)*itemsize));
    4-byte dtypes keep smaller caps so double-buffered tiles stay within
    v7x's ~43 MiB effective budget.
    """
    if itemsize <= 1:
        big = ((1024, 2048, 1024), (1024, 1024, 1024), (768, 1024, 1024),
               (512, 1024, 1024))
    elif itemsize == 2:
        big = ((1024, 1024, 1024), (768, 1024, 768), (512, 1024, 1024),
               (512, 1024, 512))
    else:
        big = ((512, 1024, 1024), (512, 512, 1024), (384, 512, 1024))
    small = ((256, 512, 1024), (256, 512, 512), (256, 256, 512),
             (128, 256, 512), (128, 128, 512), (128, 128, 256),
             (64, 128, 256), (32, 128, 128), (16, 128, 128), (8, 128, 128))
    return big + small


def _balance(dim, tile, align):
    """Shrink `tile` (keeping alignment) so padding of `dim` is minimized."""
    nblk = _cdiv(dim, tile)
    return max(align, _round_up(_cdiv(dim, nblk), align))


def _balance_lane(dim, tile, max_waste=0.12):
    """Prefer 256-aligned lane tiles (v6e/v7x MXU) when padding cost is small."""
    t256 = _balance(dim, tile, 256)
    t128 = _balance(dim, tile, 128)
    if _round_up(dim, t256) <= _round_up(dim, t128) * (1.0 + max_waste):
        return t256
    return t128


def _pick_tiles(M, N, K, x_item, y_item, out_item, needs_scratch, budget,
                ncores):
    tm_cap = max(_round_up(M, 8), 8)
    tn_cap = max(_round_up(N, 128), 128)
    tk_cap = max(_round_up(K, 128), 128)

    def vmem_bytes(tm, tn, tk):
        nk = _cdiv(K, tk)
        scratch = tm * tn * 4 if (nk > 1 and needs_scratch) else 0
        # double-buffered inputs + double-buffered output + optional scratch
        return (2 * tm * tk * x_item + 2 * tk * tn * y_item
                + 2 * tm * tn * out_item + scratch)

    tm, tn, tk = min(8, tm_cap), 128, 128
    for ctm, ctn, ctk in _tile_configs(max(x_item, y_item)):
        ctm, ctn, ctk = min(ctm, tm_cap), min(ctn, tn_cap), min(ctk, tk_cap)
        if vmem_bytes(ctm, ctn, ctk) <= budget:
            tm, tn, tk = ctm, ctn, ctk
            break

    # Trim tiles so padding waste is minimal; prefer 256-aligned lane dims.
    btm = _balance(M, tm, 8)
    btn = _balance_lane(N, tn)
    btk = _balance_lane(K, tk)
    if vmem_bytes(btm, btn, btk) <= budget:
        tm, tn, tk = btm, btn, btk
    else:
        tm = _balance(M, tm, 8)
        tn = _balance(N, tn, 128)
        tk = _balance(K, tk, 128)

    # Dual-TensorCore chips only: ensure >=2 independent (i, j) blocks when
    # possible.  Single-TC chips (v5e/v6e) skip this: splitting a one-block
    # problem only adds grid overhead.
    if ncores >= 2 and _cdiv(M, tm) * _cdiv(N, tn) < 2:
        if tn >= 256:
            tn = _balance(N, max(128, tn // 2), 128)
        elif tm >= 16:
            tm = _balance(M, max(8, tm // 2), 8)

    return tm, tn, tk


# ---------------------------------------------------------------------------
# Public wrapper
# ---------------------------------------------------------------------------

def matmul(x, y, *, tm=None, tn=None, tk=None):
    """Pallas equivalent of torch.matmul for 2-D x (M, K) and y (K, N)."""
    assert x.ndim == 2 and y.ndim == 2, "only the 2-D matmul case is implemented"
    M, K = x.shape
    Ky, N = y.shape
    assert K == Ky, f"inner dims must match, got {K} vs {Ky}"

    out_dtype = jnp.result_type(x.dtype, y.dtype)
    # Keep operands in their native (possibly narrower) dtype: the MXU takes
    # bf16/f16 directly with an f32 accumulator, and a wrapper astype would
    # cost a full extra HBM pass.  Only promote when the dtypes differ.
    if x.dtype != y.dtype:
        x = x.astype(out_dtype)
        y = y.astype(out_dtype)
    acc_dtype = (jnp.float32 if jnp.issubdtype(out_dtype, jnp.floating)
                 else jnp.int32)

    x_item = jnp.dtype(x.dtype).itemsize
    y_item = jnp.dtype(y.dtype).itemsize
    out_item = jnp.dtype(out_dtype).itemsize

    vmem_limit, tile_budget = _vmem_limits()

    # ---- Small-problem fast path: full arrays resident in VMEM, no grid ----
    small_bytes = x_item * M * K + y_item * K * N + out_item * M * N
    if (tm is None and tn is None and tk is None
            and small_bytes <= min(tile_budget, 8 * 1024 * 1024)):
        kernel = functools.partial(_matmul_kernel_direct, acc_dtype=acc_dtype)
        return pl.pallas_call(
            kernel,
            out_shape=jax.ShapeDtypeStruct((M, N), out_dtype),
            compiler_params=pltpu.CompilerParams(
                vmem_limit_bytes=vmem_limit),
            cost_estimate=pl.CostEstimate(
                flops=2 * M * N * K,
                transcendentals=0,
                bytes_accessed=small_bytes),
        )(x, y)

    # ---- General tiled path -------------------------------------------------
    needs_scratch = jnp.dtype(out_dtype) != jnp.dtype(acc_dtype)
    atm, atn, atk = _pick_tiles(M, N, K, x_item, y_item, out_item,
                                needs_scratch, tile_budget,
                                _num_tensorcores())
    tm = tm or atm
    tn = tn or atn
    tk = tk or atk

    # Zero-padding K is required for correctness (OOB VMEM reads return
    # garbage, not zeros); padded M/N rows/cols are sliced off below.
    Mp, Np, Kp = _round_up(M, tm), _round_up(N, tn), _round_up(K, tk)
    if (Mp, Kp) != (M, K):
        x = jnp.pad(x, ((0, Mp - M), (0, Kp - K)))
    if (Kp, Np) != (K, N):
        y = jnp.pad(y, ((0, Kp - K), (0, Np - N)))

    gm, gn, gk = Mp // tm, Np // tn, Kp // tk

    cost = pl.CostEstimate(
        flops=2 * M * N * K,
        transcendentals=0,
        # Actual tiled traffic: x re-streamed gn times, y re-streamed gm times.
        bytes_accessed=(gn * Mp * Kp * x_item + gm * Kp * Np * y_item
                        + Mp * Np * out_item),
    )

    if gk == 1:
        # No K reduction: no accumulator, no reduction grid axis.
        kernel = functools.partial(_matmul_kernel_direct, acc_dtype=acc_dtype)
        grid = (gm, gn)
        in_specs = [
            pl.BlockSpec((tm, tk), lambda i, j: (i, 0)),
            pl.BlockSpec((tk, tn), lambda i, j: (0, j)),
        ]
        out_specs = pl.BlockSpec((tm, tn), lambda i, j: (i, j))
        scratch_shapes = []
        dim_sem = ("parallel", "parallel")
    else:
        grid = (gm, gn, gk)
        in_specs = [
            pl.BlockSpec((tm, tk), lambda i, j, k: (i, k)),
            pl.BlockSpec((tk, tn), lambda i, j, k: (k, j)),
        ]
        out_specs = pl.BlockSpec((tm, tn), lambda i, j, k: (i, j))
        dim_sem = ("parallel", "parallel", "arbitrary")
        if needs_scratch:
            kernel = _matmul_kernel_acc
            scratch_shapes = [pltpu.VMEM((tm, tn), acc_dtype)]
        else:
            # Output dtype == accumulator dtype (f32/int32): accumulate in
            # place in the resident output tile.
            kernel = _matmul_kernel_inplace
            scratch_shapes = []

    out = pl.pallas_call(
        kernel,
        out_shape=jax.ShapeDtypeStruct((Mp, Np), out_dtype),
        grid_spec=pltpu.PrefetchScalarGridSpec(
            num_scalar_prefetch=0,
            grid=grid,
            in_specs=in_specs,
            out_specs=out_specs,
            scratch_shapes=scratch_shapes,
        ),
        compiler_params=pltpu.CompilerParams(
            dimension_semantics=dim_sem,
            vmem_limit_bytes=vmem_limit,
        ),
        cost_estimate=cost,
    )(x, y)

    if (Mp, Np) != (M, N):
        out = out[:M, :N]
    return out


if __name__ == "__main__":
    key = jax.random.PRNGKey(0)
    k1, k2, k3, k4 = jax.random.split(key, 4)

    # Small shapes consistent with torch.matmul on 2-D tensors:
    # x: (M, K) = (8, 32), y: (K, N) = (32, 16) -> exercises the fast path.
    M, K, N = 8, 32, 16
    x = jax.random.normal(k1, (M, K), dtype=jnp.float32)
    y = jax.random.normal(k2, (K, N), dtype=jnp.float32)

    out = matmul(x, y)
    jax.block_until_ready(out)
    ref = jnp.matmul(x, y, precision=jax.lax.Precision.HIGHEST)
    assert out.shape == (M, N)
    assert jnp.allclose(out, ref, atol=1e-2, rtol=1e-2), "small-case mismatch"

    # Larger, non-tile-aligned case: exercises padding, the K-reduction grid
    # axis and the in-place f32 accumulation path.
    Mb, Kb, Nb = 300, 2560, 520
    xb = jax.random.normal(k3, (Mb, Kb), dtype=jnp.float32)
    yb = jax.random.normal(k4, (Kb, Nb), dtype=jnp.float32)

    outb = matmul(xb, yb)
    jax.block_until_ready(outb)
    refb = jnp.matmul(xb, yb, precision=jax.lax.Precision.HIGHEST)
    assert outb.shape == (Mb, Nb)
    rel_err = float(jnp.max(jnp.abs(outb - refb)) / jnp.max(jnp.abs(refb)))
    assert rel_err < 1e-2, f"large-case mismatch vs reference (rel_err={rel_err})"

    print("KERNEL_OK")
</pallas_src>

<mosaic_0001>
module attributes {stable_mosaic.version = 11 : i64} {
  func.func @_matmul_kernel_direct(%arg0: memref<8x32xf32, #tpu.memory_space<vmem>>, %arg1: memref<32x16xf32, #tpu.memory_space<vmem>>, %arg2: memref<8x16xf32, #tpu.memory_space<vmem>>) attributes {dimension_semantics = [], scalar_prefetch = 0 : i64, scratch_operands = 0 : i64, tpu.core_type = #tpu.core_type<tc>} {
    %c0 = arith.constant 0 : index
    %c0_0 = arith.constant 0 : index
    %0 = vector.load %arg0[%c0, %c0_0] : memref<8x32xf32, #tpu.memory_space<vmem>>, vector<8x32xf32>
    %c0_1 = arith.constant 0 : index
    %c0_2 = arith.constant 0 : index
    %1 = vector.load %arg1[%c0_1, %c0_2] : memref<32x16xf32, #tpu.memory_space<vmem>>, vector<32x16xf32>
    %cst = arith.constant dense<0.000000e+00> : vector<8x16xf32>
    %2 = tpu.matmul %0, %1, %cst {dimension_numbers = #tpu.dot_dimension_numbers<[1], [0], [0], [1], [0, 0, 1, 1], [], []>} : vector<8x32xf32>, vector<32x16xf32>, vector<8x16xf32> -> vector<8x16xf32>
    %c0_3 = arith.constant 0 : index
    %c0_4 = arith.constant 0 : index
    %3 = vector.load %arg2[%c0_3, %c0_4] : memref<8x16xf32, #tpu.memory_space<vmem>>, vector<8x16xf32>
    tpu.vector_store %arg2[%c0_3, %c0_4], %2 {strides = array<i32>} : memref<8x16xf32, #tpu.memory_space<vmem>>, vector<8x16xf32>,
    return
  }
}

</mosaic_0001>

<llo_original>
// kernel: tpu_custom_call.1
$region0: #{tpu_custom_call.1}
  #allocation0 [shape = 'u32[]', space=smem, size = 0x4, offset = 0x4, fixed_abs, tag = 'smem constant byte address 0x4 - core index']
  #allocation1 [shape = 'u32[72,128]{1,0:T(1,128)}', space=vmem, size = 0x9000, scoped, tag = 'internal scratch']
  %s0 = inlined_call_operand.vmem [shape: f32[8,32], index: 0, kind: input, shape index: {}]
  %s1 = inlined_call_operand.vmem [shape: f32[32,16], index: 1, kind: input, shape index: {}]
  %s2 = inlined_call_operand.hbm [shape: f32[8,16], index: 2, kind: output, shape index: {}]
  %s3 = sld [smem:[#allocation0]]
  $region18: #{tpu_custom_call.1} parent=0
    _
  %s5 = ssub.s32 1, %s3
  %s6 = scalar_select 0, %s5, %s3
  $region1: #{tpu_custom_call.1} parent=0
    #allocation2 [shape = 'u8[4096]{0}', space=vmem, size = 0x1000, scoped, tag = 'output window, operand 0, single buffered']
    #allocation3 [shape = 's32[1]{0}', space=sflag, size = 0x4, scoped, tag = 'scoped memory for tpu_custom_call.1']
    %7 = vsyncpa [#allocation3], 0
    // Predicated region
    $region2: #{tpu_custom_call.1} parent=1 // pred_check
      _
    $region3: #{tpu_custom_call.1} parent=1 // pred_check_branch
      %9 = sbr.rel (0) target = $region5
    $region4: #{tpu_custom_call.1} parent=1 // pred_region
      _
    $region5: #{tpu_custom_call.1} parent=1 // pred_fallthru
      _
    // Predicated region
    $region6: #{tpu_custom_call.1} parent=1 // pred_check
      _
    $region7: #{tpu_custom_call.1} parent=1 // pred_check_branch
      %11 = sbr.rel (0) target = $region9
    $region8: #{tpu_custom_call.1} parent=1 // pred_region
      _
    $region9: #{tpu_custom_call.1} parent=1 // pred_fallthru
      _
    %v12 = vld [vmem:[%s0] sm:$0xff]
    %v13 = vld [vmem:[%s1] sm:$0xff]
    %v14 = vld [vmem:[%s1 + $0x8] sm:$0xff]
    %v15 = vld [vmem:[%s1 + $0x10] sm:$0xff]
    %v16 = vld [vmem:[%s1 + $0x18] sm:$0xff]
    %vm17 = vcmask 261120
    %v19 = vsel %vm17, %v12, 0
    %21 = vmatpush.msra.mxu0 0.0
    %22 = vmatpush.msra.mxu0 0.0
    %23 = vmatpush.msra.mxu0 0.0
    %24 = vmatpush.msra.mxu0 0.0
    %25 = vmatpush.msra.mxu0 0.0
    %26 = vmatpush.msra.mxu0 0.0
    %27 = vmatpush.msra.mxu0 0.0
    %28 = vmatpush.msra.mxu0 0.0
    %29 = vmatpush.msra.mxu0 0.0
    %30 = vmatpush.msra.mxu0 0.0
    %31 = vmatpush.msra.mxu0 0.0
    %32 = vmatpush.msra.mxu0 0.0
    %33 = vmatpush.msra.mxu0 %v16
    %34 = vmatpush.msra.mxu0 %v15
    %35 = vmatpush.msra.mxu0 %v14
    %36 = vmatpush.msra.mxu0 %v13
    %37 = vmatmul.f32.gmra.mxu0 %v19
    %v38 = vpop.f32.mrf.mxu0
    %v39 = vadd.f32 0.0, %v38
    %40 = vdwg.mxu0
    %vm41 = vcmask 130048
    %42 = vst.msk [vmem:[#allocation2] sm:$0xff] %vm41, %v39
    // Predicated region
    $region10: #{tpu_custom_call.1} parent=1 // pred_check
      _
    $region11: #{tpu_custom_call.1} parent=1 // pred_check_branch
      %44 = sbr.rel (0) target = $region13
    $region12: #{tpu_custom_call.1} parent=1 // pred_region
      %46 = vsyncadd [#allocation3], 0
      %s48 = sshll.u32 [#allocation2], 4
      %s49 = int_to_ptr.vmem [resolvable:$true] %s48
      %s50 = sshll.u32 %s2, 4
      %s51 = int_to_ptr.hbm [resolvable:$true] %s50
      %53 = dma.vmem_to_hbm [thread:$0]  %s49, 128, %s51, [#allocation3]
    $region13: #{tpu_custom_call.1} parent=1 // pred_fallthru
      _
    // Predicated region
    $region14: #{tpu_custom_call.1} parent=1 // pred_check
      _
    $region15: #{tpu_custom_call.1} parent=1 // pred_check_branch
      %55 = sbr.rel (0) target = $region17
    $region16: #{tpu_custom_call.1} parent=1 // pred_region
      %57 = dma.done [#allocation3], 128
    $region17: #{tpu_custom_call.1} parent=1 // pred_fallthru
      _
    %58 = vsyncpa [#allocation3], 1

</llo_original>
